<compile_context>
chip_gen: v6e
topology: v6e:2x2x1
jax: 0.10.0
libtpu: 0.0.40
codegen_flags: <defaults>
</compile_context>

<pallas_src>
import jax
import jax.numpy as jnp
from jax.experimental import pallas as pl
from jax.experimental.pallas import tpu as pltpu


def ppi_kernel(p1_ref, p2_ref, w_ref, b_ref, o_ref):
    w = w_ref[...]                                   # (A, H) bf16, resident across grid
    b = b_ref[...]                                   # (1, H) f32,  resident across grid
    # In-kernel bf16 cast of the streamed f32 tiles (cheap VPU op, hidden under DMA).
    p1 = p1_ref[...].astype(jnp.bfloat16)            # (bt, A)
    p2 = p2_ref[...].astype(jnp.bfloat16)            # (bt, A)
    # Two back-to-back MXU dots against the same resident weight (no concat copy).
    y1 = jnp.maximum(jnp.dot(p1, w, preferred_element_type=jnp.float32) + b, 0.0)
    y2 = jnp.maximum(jnp.dot(p2, w, preferred_element_type=jnp.float32) + b, 0.0)
    s = jnp.sum(y1 * y2, axis=1, keepdims=True)      # (bt, 1) f32
    # sigmoid(s) = 1 / (1 + exp(-s)); exp + approximate reciprocal both run on the EUP.
    o_ref[...] = pl.reciprocal(1.0 + jnp.exp(-s), approx=True)


def _round_up(x, m):
    return ((x + m - 1) // m) * m


def _vmem_capacity_bytes():
    """Physical VMEM per TensorCore; falls back to the v5e/v6e value if unknown."""
    try:
        info = pltpu.get_tpu_info()
        cap = getattr(info, "vmem_capacity_bytes", None)
        if cap:
            return int(cap)
    except Exception:
        pass
    return 128 * 1024 * 1024


def _tile_footprint_bytes(bt, A, H):
    """Per-step VMEM footprint for a batch tile of bt rows."""
    in_bytes = 2 * 2 * bt * A * 4            # p1, p2 streamed f32, double-buffered
    params = 2 * (A * H * 2) + 2 * (H * 4)   # resident weight (bf16) + bias (f32), 2x-buffered
    work = 2 * bt * A * 2                    # in-kernel bf16 copies of p1, p2 tiles
    work += 2 * bt * H * 4                   # y1, y2 f32 activations
    work += bt * H * 4                       # y1 * y2 temporary
    out_bytes = 2 * bt * 1 * 4               # (bt, 1) f32 output column, double-buffered
    return in_bytes + params + work + out_bytes


def _choose_b_tile(B, A, H, max_tile=8192):
    """Pick (b_tile, vmem_limit_bytes).

    Largest batch tile (multiple of 8) that (a) fits a generation-aware VMEM
    budget, (b) is capped at max_tile, and (c) leaves >= 2 grid steps so both
    TensorCores on v7x get work."""
    cap = _vmem_capacity_bytes()
    # Scoped VMEM limit: <= ~48 MiB on v7x (64 MiB physical), up to 64 MiB on v5e/v6e.
    vmem_limit = min(3 * cap // 4, 64 * 1024 * 1024)
    budget = vmem_limit - 4 * 1024 * 1024    # headroom for compiler scratch

    half = _round_up(max(-(-B // 2), 8), 8)  # >= 2 tiles when B > 8 (v7x megacore)
    bt = min(max_tile, half)
    bt = _round_up(max(bt, 8), 8)
    while bt > 8 and _tile_footprint_bytes(bt, A, H) > budget:
        bt = _round_up(max(bt // 2, 8), 8)
    return bt, vmem_limit


def ppi_forward(annots_p1, annots_p2, fc_w_t, fc_b, *, b_tile=None):
    """annots_p1/p2: (B, A) f32; fc_w_t: (A, H) pre-transposed; fc_b: (H,) -> (B, 1) f32."""
    B, A = annots_p1.shape
    H = fc_w_t.shape[1]
    if b_tile is None:
        b_tile, vmem_limit = _choose_b_tile(B, A, H)
    else:
        _, vmem_limit = _choose_b_tile(B, A, H)

    n_tiles = pl.cdiv(B, b_tile)

    # Only the tiny resident params are converted in the wrapper (one-time, negligible);
    # the big streamed activations stay in their native f32 dtype (no extra HBM pass).
    w = fc_w_t.astype(jnp.bfloat16)          # (A, H)
    b = fc_b.reshape(1, H).astype(jnp.float32)

    out = pl.pallas_call(
        ppi_kernel,
        out_shape=jax.ShapeDtypeStruct((B, 1), jnp.float32),
        grid=(n_tiles,),
        in_specs=[
            pl.BlockSpec((b_tile, A), lambda i: (i, 0)),   # p1 tile (pipelined)
            pl.BlockSpec((b_tile, A), lambda i: (i, 0)),   # p2 tile (pipelined)
            pl.BlockSpec((A, H), lambda i: (0, 0)),        # weight, resident across grid
            pl.BlockSpec((1, H), lambda i: (0, 0)),        # bias, resident across grid
        ],
        out_specs=pl.BlockSpec((b_tile, 1), lambda i: (i, 0)),
        compiler_params=pltpu.CompilerParams(
            dimension_semantics=("parallel",),
            vmem_limit_bytes=vmem_limit,
        ),
    )(annots_p1, annots_p2, w, b)
    return out


def init_params(key, annots_length, hidden_dim):
    """Deterministic PyTorch-style Linear init (uniform +/- 1/sqrt(fan_in))."""
    k1, k2, k3, k4 = jax.random.split(key, 4)
    bound_fc = 1.0 / (annots_length ** 0.5)
    fc_w = jax.random.uniform(k1, (hidden_dim, annots_length), jnp.float32,
                              -bound_fc, bound_fc)           # torch layout (H, A)
    fc_b = jax.random.uniform(k2, (hidden_dim,), jnp.float32, -bound_fc, bound_fc)
    bound_out = 1.0 / (hidden_dim ** 0.5)
    out_w = jax.random.uniform(k3, (1, hidden_dim), jnp.float32,
                               -bound_out, bound_out)        # unused in forward
    out_b = jax.random.uniform(k4, (1,), jnp.float32, -bound_out, bound_out)
    return fc_w, fc_b, out_w, out_b


if __name__ == "__main__":
    B = 200   # batch; exercises >=2 grid tiles AND a masked partial last block
    A = 64    # annots_length
    H = 32    # hidden_dim

    key = jax.random.PRNGKey(0)
    kp1, kp2, kparams = jax.random.split(key, 3)

    annots_p1 = jax.random.uniform(kp1, (B, A), jnp.float32)
    annots_p2 = jax.random.uniform(kp2, (B, A), jnp.float32)
    fc_w, fc_b, out_w, out_b = init_params(kparams, A, H)

    fc_w_t = fc_w.T                                   # (A, H) kernel-friendly layout

    out = ppi_forward(annots_p1, annots_p2, fc_w_t, fc_b)
    out = jax.block_until_ready(out)

    # Reference in plain f32 JAX (matches PyTorch eval-mode semantics).
    x1 = jnp.maximum(annots_p1 @ fc_w.T + fc_b, 0.0)
    x2 = jnp.maximum(annots_p2 @ fc_w.T + fc_b, 0.0)
    ref = jax.nn.sigmoid(jnp.sum(x1 * x2, axis=1, keepdims=True))

    assert out.shape == (B, 1)
    assert bool(jnp.all(jnp.isfinite(out)))  # tail-block garbage must not leak into valid rows
    # bf16 MXU operands + approx reciprocal -> loose-but-tight-enough tolerance.
    assert jnp.allclose(out, ref, atol=2e-2, rtol=2e-2)

    print("KERNEL_OK")
</pallas_src>

<mosaic_0001>
module attributes {stable_mosaic.version = 11 : i64} {
  func.func @ppi_kernel(%arg0: i32, %arg1: memref<104x64xf32, #tpu.memory_space<vmem>>, %arg2: memref<104x64xf32, #tpu.memory_space<vmem>>, %arg3: memref<64x32xbf16, #tpu.memory_space<vmem>>, %arg4: memref<1x32xf32, #tpu.memory_space<vmem>>, %arg5: memref<104x1xf32, #tpu.memory_space<vmem>>) attributes {dimension_semantics = [#tpu.dimension_semantics<parallel>], iteration_bounds = array<i64: 2>, scalar_prefetch = 0 : i64, scratch_operands = 0 : i64, tpu.core_type = #tpu.core_type<tc>, window_params = [{transform_indices = @transform_0, window_bounds = array<i64: 104, 64>}, {transform_indices = @transform_1, window_bounds = array<i64: 104, 64>}, {pipeline_mode = #tpu.pipeline_mode<synchronous>, transform_indices = @transform_2, window_bounds = array<i64: 64, 32>}, {pipeline_mode = #tpu.pipeline_mode<synchronous>, transform_indices = @transform_3, window_bounds = array<i64: 1, 32>}, {transform_indices = @transform_4, window_bounds = array<i64: 104, 1>}]} {
    %c0 = arith.constant 0 : index
    %c0_0 = arith.constant 0 : index
    %0 = vector.load %arg3[%c0, %c0_0] : memref<64x32xbf16, #tpu.memory_space<vmem>>, vector<64x32xbf16>
    %c0_1 = arith.constant 0 : index
    %c0_2 = arith.constant 0 : index
    %1 = vector.load %arg4[%c0_1, %c0_2] : memref<1x32xf32, #tpu.memory_space<vmem>>, vector<1x32xf32>
    %c0_3 = arith.constant 0 : index
    %c0_4 = arith.constant 0 : index
    %2 = vector.load %arg1[%c0_3, %c0_4] : memref<104x64xf32, #tpu.memory_space<vmem>>, vector<104x64xf32>
    %3 = arith.truncf %2 : vector<104x64xf32> to vector<104x64xbf16>
    %c0_5 = arith.constant 0 : index
    %c0_6 = arith.constant 0 : index
    %4 = vector.load %arg2[%c0_5, %c0_6] : memref<104x64xf32, #tpu.memory_space<vmem>>, vector<104x64xf32>
    %5 = arith.truncf %4 : vector<104x64xf32> to vector<104x64xbf16>
    %cst = arith.constant dense<0.000000e+00> : vector<104x32xf32>
    %6 = tpu.matmul %3, %0, %cst {dimension_numbers = #tpu.dot_dimension_numbers<[1], [0], [0], [1], [0, 0, 1, 1], [], []>} : vector<104x64xbf16>, vector<64x32xbf16>, vector<104x32xf32> -> vector<104x32xf32>
    %7 = vector.broadcast %1 : vector<1x32xf32> to vector<104x32xf32>
    %8 = arith.addf %6, %7 : vector<104x32xf32>
    %cst_7 = arith.constant 0.000000e+00 : f32
    %9 = vector.broadcast %cst_7 : f32 to vector<104x32xf32>
    %10 = arith.maximumf %8, %9 : vector<104x32xf32>
    %cst_8 = arith.constant dense<0.000000e+00> : vector<104x32xf32>
    %11 = tpu.matmul %5, %0, %cst_8 {dimension_numbers = #tpu.dot_dimension_numbers<[1], [0], [0], [1], [0, 0, 1, 1], [], []>} : vector<104x64xbf16>, vector<64x32xbf16>, vector<104x32xf32> -> vector<104x32xf32>
    %12 = vector.broadcast %1 : vector<1x32xf32> to vector<104x32xf32>
    %13 = arith.addf %11, %12 : vector<104x32xf32>
    %cst_9 = arith.constant 0.000000e+00 : f32
    %14 = vector.broadcast %cst_9 : f32 to vector<104x32xf32>
    %15 = arith.maximumf %13, %14 : vector<104x32xf32>
    %16 = arith.mulf %10, %15 : vector<104x32xf32>
    %cst_10 = arith.constant dense<0.000000e+00> : vector<104xf32>
    %17 = vector.multi_reduction <add>, %16, %cst_10 [1] : vector<104x32xf32> to vector<104xf32>
    %18 = vector.shape_cast %17 : vector<104xf32> to vector<104x1xf32>
    %cst_11 = arith.constant 0.000000e+00 : f32
    %19 = vector.broadcast %cst_11 : f32 to vector<104x1xf32>
    %20 = arith.subf %19, %18 : vector<104x1xf32>
    %21 = math.exp %20 : vector<104x1xf32>
    %cst_12 = arith.constant 1.000000e+00 : f32
    %22 = vector.broadcast %cst_12 : f32 to vector<104x1xf32>
    %23 = arith.addf %22, %21 : vector<104x1xf32>
    %24 = tpu.reciprocal %23 {approx = true} : vector<104x1xf32> -> vector<104x1xf32>
    %c0_13 = arith.constant 0 : index
    %c0_14 = arith.constant 0 : index
    %25 = vector.load %arg5[%c0_13, %c0_14] : memref<104x1xf32, #tpu.memory_space<vmem>>, vector<104x1xf32>
    tpu.vector_store %arg5[%c0_13, %c0_14], %24 {strides = array<i32>} : memref<104x1xf32, #tpu.memory_space<vmem>>, vector<104x1xf32>,
    return
  }
  func.func @transform_0(%arg0: i32) -> (i32, i32) {
    %c0_i32 = arith.constant 0 : i32
    %c0_i32_0 = arith.constant 0 : i32
    return %arg0, %c0_i32 : i32, i32
  }
  func.func @transform_1(%arg0: i32) -> (i32, i32) {
    %c0_i32 = arith.constant 0 : i32
    %c0_i32_0 = arith.constant 0 : i32
    return %arg0, %c0_i32 : i32, i32
  }
  func.func @transform_2(%arg0: i32) -> (i32, i32) {
    %c0_i32 = arith.constant 0 : i32
    %c0_i32_0 = arith.constant 0 : i32
    %c0_i32_1 = arith.constant 0 : i32
    return %c0_i32, %c0_i32_0 : i32, i32
  }
  func.func @transform_3(%arg0: i32) -> (i32, i32) {
    %c0_i32 = arith.constant 0 : i32
    %c0_i32_0 = arith.constant 0 : i32
    %c0_i32_1 = arith.constant 0 : i32
    return %c0_i32, %c0_i32_0 : i32, i32
  }
  func.func @transform_4(%arg0: i32) -> (i32, i32) {
    %c0_i32 = arith.constant 0 : i32
    %c0_i32_0 = arith.constant 0 : i32
    return %arg0, %c0_i32 : i32, i32
  }
}

</mosaic_0001>

<llo_original>
// kernel: tpu_custom_call.1
$region0: #{tpu_custom_call.1}
  #allocation0 [shape = 'u32[]', space=smem, size = 0x4, offset = 0x4, fixed_abs, tag = 'smem constant byte address 0x4 - core index']
  #allocation1 [shape = 'u32[144,128]{1,0:T(1,128)}', space=vmem, size = 0x12000, scoped, tag = 'internal scratch']
  %s0 = inlined_call_operand.vmem [shape: f32[200,64], index: 0, kind: input, shape index: {}]
  %s1 = inlined_call_operand.vmem [shape: f32[200,64], index: 1, kind: input, shape index: {}]
  %s2 = inlined_call_operand.vmem [shape: bf16[64,32], index: 2, kind: input, shape index: {}]
  %s3 = inlined_call_operand.vmem [shape: f32[1,32], index: 3, kind: input, shape index: {}]
  %s4 = inlined_call_operand.vmem [shape: f32[200,1], index: 4, kind: output, shape index: {}]
  %s5 = sld [smem:[#allocation0]]
  $region97: #{tpu_custom_call.1} parent=0
    _
  %s7 = ssub.s32 1, %s5
  %s8 = scalar_select 0, %s7, %s5
  $region1: #{tpu_custom_call.1} parent=0
    #allocation2 [shape = 'u8[106496]{0}', space=vmem, size = 0x1a000, scoped, tag = 'output window, operand 0']
    loop: start=0, step=1, limit=4
    $region2: #{tpu_custom_call.1} parent=1 // loop_pre_header
      _
    $region3: #{tpu_custom_call.1} parent=1 // loop_header
      %s10 = sphi 0, %s14
      %p11 = scmp.ge.s32.totalorder %s10, 4
      %s20 = sphi 0, %s22
      %s23 = sphi 0, %s20
      %s24 = sphi 0, %s23
      %s40 = sphi 0, %s24
      %s46 = sphi 0, %s48
      %s49 = sphi 0, %s46
      %s50 = sphi 0, %s49
      %s66 = sphi 0, %s50
      %s70 = sphi 0, %s70
      %s72 = sphi 0, %s70
      %s73 = sphi 0, %s72
      %s87 = sphi 0, %s73
      %s91 = sphi 0, %s91
      %s93 = sphi 0, %s91
      %s94 = sphi 0, %s93
      %s108 = sphi 0, %s94
      %s114 = sphi 0, %s116
      %s117 = sphi 0, %s114
      %s118 = sphi 0, %s117
      %s134 = sphi 0, %s118
    $region4: #{tpu_custom_call.1} parent=1 // loop_header_branch
      %13 = sbr.rel (%p11) target = $region8
    $region5: #{tpu_custom_call.1} parent=1 // loop_body
      %s15 = ssub.s32 %s10, 1
      %s16 = ssub.s32 %s10, 2
      %s17 = sadd.s32 %s10, 1
      %s18 = ssub.s32 %s10, %s17
      %p19 = scmp.eq.s32.totalorder %s18, 0
      %s21 = sadd.s32 %s20, 1
      %s22 = scalar_select %p19, %s20, %s21
      %p25 = pneg %p19
      %p26 = scmp.eq.s32.totalorder %s10, 1
      %p27 = por %p25, %p26
      %p28 = scmp.ne.s32.totalorder %s20, %s23
      %p29 = scmp.eq.s32.totalorder %s10, 0
      %p30 = por %p28, %p29
      %p31 = scmp.ne.s32.totalorder %s20, %s23
      %p32 = scmp.eq.s32.totalorder %s15, 1
      %p33 = por %p31, %p32
      %p34 = scmp.ne.s32.totalorder %s23, %s24
      %p35 = scmp.eq.s32.totalorder %s15, 0
      %p36 = por %p34, %p35
      %p37 = scmp.ne.s32.totalorder %s23, %s24
      %p38 = scmp.eq.s32.totalorder %s16, 1
      %p39 = por %p37, %p38
      %p41 = scmp.ne.s32.totalorder %s24, %s40
      %p42 = scmp.eq.s32.totalorder %s16, 0
      %p43 = por %p41, %p42
      %s44 = ssub.s32 %s10, %s17
      %p45 = scmp.eq.s32.totalorder %s44, 0
      %s47 = sadd.s32 %s46, 1
      %s48 = scalar_select %p45, %s46, %s47
      %p51 = pneg %p45
      %p52 = scmp.eq.s32.totalorder %s10, 1
      %p53 = por %p51, %p52
      %p54 = scmp.ne.s32.totalorder %s46, %s49
      %p55 = scmp.eq.s32.totalorder %s10, 0
      %p56 = por %p54, %p55
      %p57 = scmp.ne.s32.totalorder %s46, %s49
      %p58 = scmp.eq.s32.totalorder %s15, 1
      %p59 = por %p57, %p58
      %p60 = scmp.ne.s32.totalorder %s49, %s50
      %p61 = scmp.eq.s32.totalorder %s15, 0
      %p62 = por %p60, %p61
      %p63 = scmp.ne.s32.totalorder %s49, %s50
      %p64 = scmp.eq.s32.totalorder %s16, 1
      %p65 = por %p63, %p64
      %p67 = scmp.ne.s32.totalorder %s50, %s66
      %p68 = scmp.eq.s32.totalorder %s16, 0
      %p69 = por %p67, %p68
      %s71 = sadd.s32 %s70, 1
      %p74 = scmp.eq.s32.totalorder %s10, 1
      %p75 = scmp.ne.s32.totalorder %s70, %s72
      %p76 = scmp.eq.s32.totalorder %s10, 0
      %p77 = por %p75, %p76
      %p78 = scmp.ne.s32.totalorder %s70, %s72
      %p79 = scmp.eq.s32.totalorder %s15, 1
      %p80 = por %p78, %p79
      %p81 = scmp.ne.s32.totalorder %s72, %s73
      %p82 = scmp.eq.s32.totalorder %s15, 0
      %p83 = por %p81, %p82
      %p84 = scmp.ne.s32.totalorder %s72, %s73
      %p85 = scmp.eq.s32.totalorder %s16, 1
      %p86 = por %p84, %p85
      %p88 = scmp.ne.s32.totalorder %s73, %s87
      %p89 = scmp.eq.s32.totalorder %s16, 0
      %p90 = por %p88, %p89
      %s92 = sadd.s32 %s91, 1
      %p95 = scmp.eq.s32.totalorder %s10, 1
      %p96 = scmp.ne.s32.totalorder %s91, %s93
      %p97 = scmp.eq.s32.totalorder %s10, 0
      %p98 = por %p96, %p97
      %p99 = scmp.ne.s32.totalorder %s91, %s93
      %p100 = scmp.eq.s32.totalorder %s15, 1
      %p101 = por %p99, %p100
      %p102 = scmp.ne.s32.totalorder %s93, %s94
      %p103 = scmp.eq.s32.totalorder %s15, 0
      %p104 = por %p102, %p103
      %p105 = scmp.ne.s32.totalorder %s93, %s94
      %p106 = scmp.eq.s32.totalorder %s16, 1
      %p107 = por %p105, %p106
      %p109 = scmp.ne.s32.totalorder %s94, %s108
      %p110 = scmp.eq.s32.totalorder %s16, 0
      %p111 = por %p109, %p110
      %s112 = ssub.s32 %s10, %s17
      %p113 = scmp.eq.s32.totalorder %s112, 0
      %s115 = sadd.s32 %s114, 1
      %s116 = scalar_select %p113, %s114, %s115
      %p119 = pneg %p113
      %p120 = scmp.eq.s32.totalorder %s10, 1
      %p121 = por %p119, %p120
      %p122 = scmp.ne.s32.totalorder %s114, %s117
      %p123 = scmp.eq.s32.totalorder %s10, 0
      %p124 = por %p122, %p123
      %p125 = scmp.ne.s32.totalorder %s114, %s117
      %p126 = scmp.eq.s32.totalorder %s15, 1
      %p127 = por %p125, %p126
      %p128 = scmp.ne.s32.totalorder %s117, %s118
      %p129 = scmp.eq.s32.totalorder %s15, 0
      %p130 = por %p128, %p129
      %p131 = scmp.ne.s32.totalorder %s117, %s118
      %p132 = scmp.eq.s32.totalorder %s16, 1
      %p133 = por %p131, %p132
      %p135 = scmp.ne.s32.totalorder %s118, %s134
      %p136 = scmp.eq.s32.totalorder %s16, 0
      %p137 = por %p135, %p136
      %p138 = scmp.le.s32.totalorder 1, %s10
      %p139 = scmp.lt.s32.totalorder %s10, 3
      %p140 = pnand %p138, %p139
      %p141 = pneg %p140
      // Predicated region
      $region9: #{tpu_custom_call.1} parent=5 // pred_check
        _
      $region10: #{tpu_custom_call.1} parent=5 // pred_check_branch
        %143 = sbr.rel (%p140) target = $region12
      $region11: #{tpu_custom_call.1} parent=5 // pred_region
        %s144 = ssub.s32 %s10, 1
        // Predicated region
        $region13: #{tpu_custom_call.1} parent=11 // pred_check
          %p145 = pneg %p83
        $region14: #{tpu_custom_call.1} parent=11 // pred_check_branch
          %147 = sbr.rel (%p145) target = $region16
        $region15: #{tpu_custom_call.1} parent=11 // pred_region
          _
        $region16: #{tpu_custom_call.1} parent=11 // pred_fallthru
          _
        // Predicated region
        $region17: #{tpu_custom_call.1} parent=11 // pred_check
          %p148 = pneg %p104
        $region18: #{tpu_custom_call.1} parent=11 // pred_check_branch
          %150 = sbr.rel (%p148) target = $region20
        $region19: #{tpu_custom_call.1} parent=11 // pred_region
          _
        $region20: #{tpu_custom_call.1} parent=11 // pred_fallthru
          _
      $region12: #{tpu_custom_call.1} parent=5 // pred_fallthru
        _
      %p151 = scmp.lt.s32.totalorder %s10, 2
      // Predicated region
      $region21: #{tpu_custom_call.1} parent=5 // pred_check
        %p152 = pneg %p151
      $region22: #{tpu_custom_call.1} parent=5 // pred_check_branch
        %154 = sbr.rel (%p152) target = $region24
      $region23: #{tpu_custom_call.1} parent=5 // pred_region
        // Predicated region
        $region25: #{tpu_custom_call.1} parent=23 // pred_check
          %p155 = pneg %p30
        $region26: #{tpu_custom_call.1} parent=23 // pred_check_branch
          %157 = sbr.rel (%p155) target = $region28
        $region27: #{tpu_custom_call.1} parent=23 // pred_region
          %s158 = smul.u32 13, %s10
          %s159 = ssub.s32 25, %s158
          %p160 = scmp.lt.s32.totalorder %s159, 13
          %s161 = scalar_select %p160, %s159, 13
          %s162 = smul.u32 128, %s161
          %p163 = scmp.lt.s32.totalorder %s158, 24
          %s164 = scalar_select %p163, %s158, 24
          %s165 = smul.addr %s164, 8
          %s166 = scalar_lea.vmem %s0, %s165
          %s167 = smul.u32 13, %s10
          %s168 = ssub.s32 25, %s167
          %p169 = scmp.lt.s32.totalorder %s168, 13
          %s170 = scalar_select %p169, %s168, 13
          %s171 = smul.u32 128, %s170
        $region28: #{tpu_custom_call.1} parent=23 // pred_fallthru
          _
        // Predicated region
        $region29: #{tpu_custom_call.1} parent=23 // pred_check
          %p172 = pneg %p56
        $region30: #{tpu_custom_call.1} parent=23 // pred_check_branch
          %174 = sbr.rel (%p172) target = $region32
        $region31: #{tpu_custom_call.1} parent=23 // pred_region
          %s175 = smul.u32 13, %s10
          %s176 = ssub.s32 25, %s175
          %p177 = scmp.lt.s32.totalorder %s176, 13
          %s178 = scalar_select %p177, %s176, 13
          %s179 = smul.u32 128, %s178
          %p180 = scmp.lt.s32.totalorder %s175, 24
          %s181 = scalar_select %p180, %s175, 24
          %s182 = smul.addr %s181, 8
          %s183 = scalar_lea.vmem %s1, %s182
          %s184 = smul.u32 13, %s10
          %s185 = ssub.s32 25, %s184
          %p186 = scmp.lt.s32.totalorder %s185, 13
          %s187 = scalar_select %p186, %s185, 13
          %s188 = smul.u32 128, %s187
        $region32: #{tpu_custom_call.1} parent=23 // pred_fallthru
          _
      $region24: #{tpu_custom_call.1} parent=5 // pred_fallthru
        _
      %p189 = scmp.le.s32.totalorder 1, %s10
      %p190 = scmp.lt.s32.totalorder %s10, 3
      %p191 = pnand %p189, %p190
      %p192 = pneg %p191
      // Predicated region
      $region33: #{tpu_custom_call.1} parent=5 // pred_check
        _
      $region34: #{tpu_custom_call.1} parent=5 // pred_check_branch
        %194 = sbr.rel (%p191) target = $region36
      $region35: #{tpu_custom_call.1} parent=5 // pred_region
        %s195 = ssub.s32 %s10, 1
        %s196 = smul.u32 13, %s15
        %s197 = ssub.s32 25, %s196
        %p198 = scmp.lt.s32.totalorder %s197, 13
        %s199 = scalar_select %p198, %s197, 13
        %s200 = smul.u32 128, %s199
        %p201 = scmp.lt.s32.totalorder %s196, 24
        %s202 = scalar_select %p201, %s196, 24
        %s203 = smul.addr %s202, 8
        %s204 = scalar_lea.vmem %s0, %s203
        %p205 = pneg %p36
        %p206 = pneg %p33
        %s207 = smul.u32 13, %s15
        %s208 = ssub.s32 25, %s207
        %p209 = scmp.lt.s32.totalorder %s208, 13
        %s210 = scalar_select %p209, %s208, 13
        %s211 = smul.u32 128, %s210
        %p212 = scmp.lt.s32.totalorder %s207, 24
        %s213 = scalar_select %p212, %s207, 24
        %s214 = smul.addr %s213, 8
        %s215 = scalar_lea.vmem %s1, %s214
        %p216 = pneg %p62
        %p217 = pneg %p59
        %p218 = pneg %p83
        %p219 = pneg %p80
        %p220 = pneg %p104
        %p221 = pneg %p101
        %p222 = pneg %p130
        %p223 = pneg %p127
        %s224 = sand.u32 %s117, 1
        %s225 = sand.u32 %s117, 1
        %s226 = smul.addr %s225, 104
        %s227 = scalar_lea.vmem [#allocation2], %s226
        %s228 = smul.u32 13, %s15
        %s229 = ssub.s32 25, %s228
        %p230 = scmp.lt.s32.totalorder %s229, 13
        %s231 = scalar_select %p230, %s229, 13
        %s232 = smul.u32 128, %s231
        %p233 = scmp.lt.s32.totalorder %s228, 24
        %s234 = scalar_select %p233, %s228, 24
        %s235 = smul.addr %s234, 8
        %s236 = scalar_lea.vmem %s0, %s235
        %s237 = smul.u32 13, %s15
        %s238 = ssub.s32 25, %s237
        %p239 = scmp.lt.s32.totalorder %s238, 13
        %s240 = scalar_select %p239, %s238, 13
        %s241 = smul.u32 128, %s240
        %s242 = smul.u32 13, %s15
        %s243 = ssub.s32 25, %s242
        %p244 = scmp.lt.s32.totalorder %s243, 13
        %s245 = scalar_select %p244, %s243, 13
        %s246 = smul.u32 128, %s245
        %p247 = scmp.lt.s32.totalorder %s242, 24
        %s248 = scalar_select %p247, %s242, 24
        %s249 = smul.addr %s248, 8
        %s250 = scalar_lea.vmem %s1, %s249
        %s251 = smul.u32 13, %s15
        %s252 = ssub.s32 25, %s251
        %p253 = scmp.lt.s32.totalorder %s252, 13
        %s254 = scalar_select %p253, %s252, 13
        %s255 = smul.u32 128, %s254
        %s256 = smul.u32 13, %s15
        %s257 = ssub.s32 25, %s256
        %p258 = scmp.lt.s32.totalorder %s257, 13
        %s259 = scalar_select %p258, %s257, 13
        %s260 = smul.u32 128, %s259
        %v262 = vld [vmem:[%s2] sm:$0xf]
        %v263 = vld [vmem:[%s2 + $0x4] sm:$0xf]
        %v264 = vld [vmem:[%s2 + $0x8] sm:$0xf]
        %v265 = vld [vmem:[%s2 + $0xc] sm:$0xf]
        %v266 = vld [vmem:[%s2 + $0x10] sm:$0xf]
        %v267 = vld [vmem:[%s2 + $0x14] sm:$0xf]
        %v268 = vld [vmem:[%s2 + $0x18] sm:$0xf]
        %v269 = vld [vmem:[%s2 + $0x1c] sm:$0xf]
        %v270 = vld [vmem:[%s3] sm:$0x1]
        %v271 = vld [vmem:[%s236] sm:$0xff]
        %v272 = vld [vmem:[%s236 + $0x8] sm:$0xff]
        %v273 = vld [vmem:[%s236 + $0x10] sm:$0xff]
        %v274 = vld [vmem:[%s236 + $0x18] sm:$0xff]
        %v275 = vld [vmem:[%s236 + $0x20] sm:$0xff]
        %v276 = vld [vmem:[%s236 + $0x28] sm:$0xff]
        %v277 = vld [vmem:[%s236 + $0x30] sm:$0xff]
        %v278 = vld [vmem:[%s236 + $0x38] sm:$0xff]
        %v279 = vld [vmem:[%s236 + $0x40] sm:$0xff]
        %v280 = vld [vmem:[%s236 + $0x48] sm:$0xff]
        %v281 = vld [vmem:[%s236 + $0x50] sm:$0xff]
        %v282 = vld [vmem:[%s236 + $0x58] sm:$0xff]
        %v283 = vld [vmem:[%s236 + $0x60] sm:$0xff]
        %v284 = vpack.c.bf16 %v272, %v271
        %v285 = vpack.c.bf16 %v274, %v273
        %v286 = vpack.c.bf16 %v276, %v275
        %v287 = vpack.c.bf16 %v278, %v277
        %v288 = vpack.c.bf16 %v280, %v279
        %v289 = vpack.c.bf16 %v282, %v281
        %v290 = vpack.c.bf16 %v283, %v283
        %v291 = vld [vmem:[%s250] sm:$0xff]
        %v292 = vld [vmem:[%s250 + $0x8] sm:$0xff]
        %v293 = vld [vmem:[%s250 + $0x10] sm:$0xff]
        %v294 = vld [vmem:[%s250 + $0x18] sm:$0xff]
        %v295 = vld [vmem:[%s250 + $0x20] sm:$0xff]
        %v296 = vld [vmem:[%s250 + $0x28] sm:$0xff]
        %v297 = vld [vmem:[%s250 + $0x30] sm:$0xff]
        %v298 = vld [vmem:[%s250 + $0x38] sm:$0xff]
        %v299 = vld [vmem:[%s250 + $0x40] sm:$0xff]
        %v300 = vld [vmem:[%s250 + $0x48] sm:$0xff]
        %v301 = vld [vmem:[%s250 + $0x50] sm:$0xff]
        %v302 = vld [vmem:[%s250 + $0x58] sm:$0xff]
        %v303 = vld [vmem:[%s250 + $0x60] sm:$0xff]
        %v304 = vpack.c.bf16 %v292, %v291
        %v305 = vpack.c.bf16 %v294, %v293
        %v306 = vpack.c.bf16 %v296, %v295
        %v307 = vpack.c.bf16 %v298, %v297
        %v308 = vpack.c.bf16 %v300, %v299
        %v309 = vpack.c.bf16 %v302, %v301
        %v310 = vpack.c.bf16 %v303, %v303
        %v312 = vlaneseq
        %v313 = vshrl.u32 %v312, 7
        %v314 = vsub.s32 0, %v313
        %v315 = vrot.slane %v270, %v314
        %v325 = vunpack.c.l.b16 %v262
        %v326 = vunpack.c.l.b16 %v263
        %v327 = vunpack.c.l.b16 %v264
        %v328 = vunpack.c.l.b16 %v265
        %v329 = vunpack.c.l.b16 %v266
        %v330 = vunpack.c.l.b16 %v267
        %v331 = vunpack.c.l.b16 %v268
        %v332 = vunpack.c.l.b16 %v269
        %v333 = vpack.c.b16 %v326, %v325
        %v334 = vpack.c.b16 %v328, %v327
        %v335 = vpack.c.b16 %v330, %v329
        %v336 = vpack.c.b16 %v332, %v331
        %vm341 = vcmask 523264
        %v343 = vsel %vm341, %v284, 0
        %v346 = vsel %vm341, %v285, 0
        %v349 = vsel %vm341, %v286, 0
        %v352 = vsel %vm341, %v287, 0
        %v355 = vsel %vm341, %v288, 0
        %v358 = vsel %vm341, %v289, 0
        %v361 = vsel %vm341, %v290, 0
        %363 = vmatprep.subr.bf16.mxu0 0
        %364 = vmatpush1.bf16.msra.mxu0 0
        %365 = vmatprep.subr.bf16.mxu0 0
        %366 = vmatpush1.bf16.msra.mxu0 0
        %367 = vmatprep.subr.bf16.mxu0 0
        %368 = vmatpush1.bf16.msra.mxu0 0
        %369 = vmatprep.subr.bf16.mxu0 0
        %370 = vmatpush1.bf16.msra.mxu0 0
        %371 = vmatprep.subr.bf16.mxu0 0
        %372 = vmatpush1.bf16.msra.mxu0 %v336
        %373 = vmatprep.subr.bf16.mxu0 0
        %374 = vmatpush1.bf16.msra.mxu0 %v335
        %375 = vmatprep.subr.bf16.mxu0 0
        %376 = vmatpush1.bf16.msra.mxu0 %v334
        %377 = vmatprep.subr.bf16.mxu0 0
        %378 = vmatpush1.bf16.msra.mxu0 %v333
        %379 = vmatprep.subr.bf16.mxu0 0
        %380 = vmatpush2.bf16.msra.mxu0 0
        %381 = vmatprep.subr.bf16.mxu0 0
        %382 = vmatpush2.bf16.msra.mxu0 0
        %383 = vmatprep.subr.bf16.mxu0 0
        %384 = vmatpush2.bf16.msra.mxu0 0
        %385 = vmatprep.subr.bf16.mxu0 0
        %386 = vmatpush2.bf16.msra.mxu0 0
        %387 = vmatprep.subr.bf16.mxu0 0
        %388 = vmatpush2.bf16.msra.mxu0 0
        %389 = vmatprep.subr.bf16.mxu0 0
        %390 = vmatpush2.bf16.msra.mxu0 0
        %391 = vmatprep.subr.bf16.mxu0 0
        %392 = vmatpush2.bf16.msra.mxu0 0
        %393 = vmatprep.subr.bf16.mxu0 0
        %394 = vmatpush2.bf16.msra.mxu0 0
        %395 = vmatprep.mubr.bf16.mxu0 0
        %396 = vmatmul.mubr.bf16.gmra.mxu0 %v343
        %v397 = vpop.f32.mrf.mxu0
        %v398 = vadd.f32 %v315, %v397
        %v399 = vpop.f32.mrf.mxu0
        %v400 = vpop.f32.mrf.mxu0
        %v401 = vadd.f32 %v315, %v400
        %v402 = vpop.f32.mrf.mxu0
        %403 = vmatprep.mubr.bf16.mxu0 0
        %404 = vmatmul.mubr.bf16.gmra.mxu0 %v346
        %v405 = vpop.f32.mrf.mxu0
        %v406 = vadd.f32 %v315, %v405
        %v407 = vpop.f32.mrf.mxu0
        %v408 = vpop.f32.mrf.mxu0
        %v409 = vadd.f32 %v315, %v408
        %v410 = vpop.f32.mrf.mxu0
        %411 = vmatprep.mubr.bf16.mxu0 0
        %412 = vmatmul.mubr.bf16.gmra.mxu0 %v349
        %v413 = vpop.f32.mrf.mxu0
        %v414 = vadd.f32 %v315, %v413
        %v415 = vpop.f32.mrf.mxu0
        %v416 = vpop.f32.mrf.mxu0
        %v417 = vadd.f32 %v315, %v416
        %v418 = vpop.f32.mrf.mxu0
        %419 = vmatprep.mubr.bf16.mxu0 0
        %420 = vmatmul.mubr.bf16.gmra.mxu0 %v352
        %v421 = vpop.f32.mrf.mxu0
        %v422 = vadd.f32 %v315, %v421
        %v423 = vpop.f32.mrf.mxu0
        %v424 = vpop.f32.mrf.mxu0
        %v425 = vadd.f32 %v315, %v424
        %v426 = vpop.f32.mrf.mxu0
        %427 = vmatprep.mubr.bf16.mxu0 0
        %428 = vmatmul.mubr.bf16.gmra.mxu0 %v355
        %v429 = vpop.f32.mrf.mxu0
        %v430 = vadd.f32 %v315, %v429
        %v431 = vpop.f32.mrf.mxu0
        %v432 = vpop.f32.mrf.mxu0
        %v433 = vadd.f32 %v315, %v432
        %v434 = vpop.f32.mrf.mxu0
        %435 = vmatprep.mubr.bf16.mxu0 0
        %436 = vmatmul.mubr.bf16.gmra.mxu0 %v358
        %v437 = vpop.f32.mrf.mxu0
        %v438 = vadd.f32 %v315, %v437
        %v439 = vpop.f32.mrf.mxu0
        %v440 = vpop.f32.mrf.mxu0
        %v441 = vadd.f32 %v315, %v440
        %v442 = vpop.f32.mrf.mxu0
        %443 = vmatprep.mubr.bf16.mxu0 0
        %444 = vmatmul.mubr.bf16.gmra.mxu0 %v361
        %v445 = vpop.f32.mrf.mxu0
        %v446 = vadd.f32 %v315, %v445
        %v447 = vpop.f32.mrf.mxu0
        %v448 = vpop.f32.mrf.mxu0
        %v449 = vpop.f32.mrf.mxu0
        %450 = vdwg.mxu0
        %v451 = vmax.f32 %v398, 0.0
        %v452 = vmax.f32 %v401, 0.0
        %v453 = vmax.f32 %v406, 0.0
        %v454 = vmax.f32 %v409, 0.0
        %v455 = vmax.f32 %v414, 0.0
        %v456 = vmax.f32 %v417, 0.0
        %v457 = vmax.f32 %v422, 0.0
        %v458 = vmax.f32 %v425, 0.0
        %v459 = vmax.f32 %v430, 0.0
        %v460 = vmax.f32 %v433, 0.0
        %v461 = vmax.f32 %v438, 0.0
        %v462 = vmax.f32 %v441, 0.0
        %v463 = vmax.f32 %v446, 0.0
        %v465 = vsel %vm341, %v304, 0
        %v468 = vsel %vm341, %v305, 0
        %v471 = vsel %vm341, %v306, 0
        %v474 = vsel %vm341, %v307, 0
        %v477 = vsel %vm341, %v308, 0
        %v480 = vsel %vm341, %v309, 0
        %v483 = vsel %vm341, %v310, 0
        %485 = vmatprep.subr.bf16.mxu0 0
        %486 = vmatpush1.bf16.msra.mxu0 0
        %487 = vmatprep.subr.bf16.mxu0 0
        %488 = vmatpush1.bf16.msra.mxu0 0
        %489 = vmatprep.subr.bf16.mxu0 0
        %490 = vmatpush1.bf16.msra.mxu0 0
        %491 = vmatprep.subr.bf16.mxu0 0
        %492 = vmatpush1.bf16.msra.mxu0 0
        %493 = vmatprep.subr.bf16.mxu0 0
        %494 = vmatpush1.bf16.msra.mxu0 %v336
        %495 = vmatprep.subr.bf16.mxu0 0
        %496 = vmatpush1.bf16.msra.mxu0 %v335
        %497 = vmatprep.subr.bf16.mxu0 0
        %498 = vmatpush1.bf16.msra.mxu0 %v334
        %499 = vmatprep.subr.bf16.mxu0 0
        %500 = vmatpush1.bf16.msra.mxu0 %v333
        %501 = vmatprep.subr.bf16.mxu0 0
        %502 = vmatpush2.bf16.msra.mxu0 0
        %503 = vmatprep.subr.bf16.mxu0 0
        %504 = vmatpush2.bf16.msra.mxu0 0
        %505 = vmatprep.subr.bf16.mxu0 0
        %506 = vmatpush2.bf16.msra.mxu0 0
        %507 = vmatprep.subr.bf16.mxu0 0
        %508 = vmatpush2.bf16.msra.mxu0 0
        %509 = vmatprep.subr.bf16.mxu0 0
        %510 = vmatpush2.bf16.msra.mxu0 0
        %511 = vmatprep.subr.bf16.mxu0 0
        %512 = vmatpush2.bf16.msra.mxu0 0
        %513 = vmatprep.subr.bf16.mxu0 0
        %514 = vmatpush2.bf16.msra.mxu0 0
        %515 = vmatprep.subr.bf16.mxu0 0
        %516 = vmatpush2.bf16.msra.mxu0 0
        %517 = vmatprep.mubr.bf16.mxu0 0
        %518 = vmatmul.mubr.bf16.gmra.mxu0 %v465
        %v519 = vpop.f32.mrf.mxu0
        %v520 = vadd.f32 %v315, %v519
        %v521 = vpop.f32.mrf.mxu0
        %v522 = vpop.f32.mrf.mxu0
        %v523 = vadd.f32 %v315, %v522
        %v524 = vpop.f32.mrf.mxu0
        %525 = vmatprep.mubr.bf16.mxu0 0
        %526 = vmatmul.mubr.bf16.gmra.mxu0 %v468
        %v527 = vpop.f32.mrf.mxu0
        %v528 = vadd.f32 %v315, %v527
        %v529 = vpop.f32.mrf.mxu0
        %v530 = vpop.f32.mrf.mxu0
        %v531 = vadd.f32 %v315, %v530
        %v532 = vpop.f32.mrf.mxu0
        %533 = vmatprep.mubr.bf16.mxu0 0
        %534 = vmatmul.mubr.bf16.gmra.mxu0 %v471
        %v535 = vpop.f32.mrf.mxu0
        %v536 = vadd.f32 %v315, %v535
        %v537 = vpop.f32.mrf.mxu0
        %v538 = vpop.f32.mrf.mxu0
        %v539 = vadd.f32 %v315, %v538
        %v540 = vpop.f32.mrf.mxu0
        %541 = vmatprep.mubr.bf16.mxu0 0
        %542 = vmatmul.mubr.bf16.gmra.mxu0 %v474
        %v543 = vpop.f32.mrf.mxu0
        %v544 = vadd.f32 %v315, %v543
        %v545 = vpop.f32.mrf.mxu0
        %v546 = vpop.f32.mrf.mxu0
        %v547 = vadd.f32 %v315, %v546
        %v548 = vpop.f32.mrf.mxu0
        %549 = vmatprep.mubr.bf16.mxu0 0
        %550 = vmatmul.mubr.bf16.gmra.mxu0 %v477
        %v551 = vpop.f32.mrf.mxu0
        %v552 = vadd.f32 %v315, %v551
        %v553 = vpop.f32.mrf.mxu0
        %v554 = vpop.f32.mrf.mxu0
        %v555 = vadd.f32 %v315, %v554
        %v556 = vpop.f32.mrf.mxu0
        %557 = vmatprep.mubr.bf16.mxu0 0
        %558 = vmatmul.mubr.bf16.gmra.mxu0 %v480
        %v559 = vpop.f32.mrf.mxu0
        %v560 = vadd.f32 %v315, %v559
        %v561 = vpop.f32.mrf.mxu0
        %v562 = vpop.f32.mrf.mxu0
        %v563 = vadd.f32 %v315, %v562
        %v564 = vpop.f32.mrf.mxu0
        %565 = vmatprep.mubr.bf16.mxu0 0
        %566 = vmatmul.mubr.bf16.gmra.mxu0 %v483
        %v567 = vpop.f32.mrf.mxu0
        %v568 = vadd.f32 %v315, %v567
        %v569 = vpop.f32.mrf.mxu0
        %v570 = vpop.f32.mrf.mxu0
        %v571 = vpop.f32.mrf.mxu0
        %572 = vdwg.mxu0
        %v573 = vmax.f32 %v520, 0.0
        %v574 = vmax.f32 %v523, 0.0
        %v575 = vmax.f32 %v528, 0.0
        %v576 = vmax.f32 %v531, 0.0
        %v577 = vmax.f32 %v536, 0.0
        %v578 = vmax.f32 %v539, 0.0
        %v579 = vmax.f32 %v544, 0.0
        %v580 = vmax.f32 %v547, 0.0
        %v581 = vmax.f32 %v552, 0.0
        %v582 = vmax.f32 %v555, 0.0
        %v583 = vmax.f32 %v560, 0.0
        %v584 = vmax.f32 %v563, 0.0
        %v585 = vmax.f32 %v568, 0.0
        %v586 = vmul.f32 %v451, %v573
        %v587 = vmul.f32 %v452, %v574
        %v588 = vmul.f32 %v453, %v575
        %v589 = vmul.f32 %v454, %v576
        %v590 = vmul.f32 %v455, %v577
        %v591 = vmul.f32 %v456, %v578
        %v592 = vmul.f32 %v457, %v579
        %v593 = vmul.f32 %v458, %v580
        %v594 = vmul.f32 %v459, %v581
        %v595 = vmul.f32 %v460, %v582
        %v596 = vmul.f32 %v461, %v583
        %v597 = vmul.f32 %v462, %v584
        %v598 = vmul.f32 %v463, %v585
        %vm599 = vcmask 261120
        %v600 = vsel %vm599, %v586, 0.0
        %601 = vadd.xlane.f32.xlu0 %v600
        %v602 = vpop.xlane.xlu0 %601
        %v603 = vsel %vm599, %v587, 0.0
        %604 = vadd.xlane.f32.xlu0 %v603
        %v605 = vpop.xlane.xlu0 %604
        %v606 = vsel %vm599, %v588, 0.0
        %607 = vadd.xlane.f32.xlu0 %v606
        %v608 = vpop.xlane.xlu0 %607
        %v609 = vsel %vm599, %v589, 0.0
        %610 = vadd.xlane.f32.xlu0 %v609
        %v611 = vpop.xlane.xlu0 %610
        %v612 = vsel %vm599, %v590, 0.0
        %613 = vadd.xlane.f32.xlu0 %v612
        %v614 = vpop.xlane.xlu0 %613
        %v615 = vsel %vm599, %v591, 0.0
        %616 = vadd.xlane.f32.xlu0 %v615
        %v617 = vpop.xlane.xlu0 %616
        %v618 = vsel %vm599, %v592, 0.0
        %619 = vadd.xlane.f32.xlu0 %v618
        %v620 = vpop.xlane.xlu0 %619
        %v621 = vsel %vm599, %v593, 0.0
        %622 = vadd.xlane.f32.xlu0 %v621
        %v623 = vpop.xlane.xlu0 %622
        %v624 = vsel %vm599, %v594, 0.0
        %625 = vadd.xlane.f32.xlu0 %v624
        %v626 = vpop.xlane.xlu0 %625
        %v627 = vsel %vm599, %v595, 0.0
        %628 = vadd.xlane.f32.xlu0 %v627
        %v629 = vpop.xlane.xlu0 %628
        %v630 = vsel %vm599, %v596, 0.0
        %631 = vadd.xlane.f32.xlu0 %v630
        %v632 = vpop.xlane.xlu0 %631
        %v633 = vsel %vm599, %v597, 0.0
        %634 = vadd.xlane.f32.xlu0 %v633
        %v635 = vpop.xlane.xlu0 %634
        %v636 = vsel %vm599, %v598, 0.0
        %637 = vadd.xlane.f32.xlu0 %v636
        %v638 = vpop.xlane.xlu0 %637
        %v639 = vsub.f32 0.0, %v602
        %v640 = vsub.f32 0.0, %v605
        %v641 = vsub.f32 0.0, %v608
        %v642 = vsub.f32 0.0, %v611
        %v643 = vsub.f32 0.0, %v614
        %v644 = vsub.f32 0.0, %v617
        %v645 = vsub.f32 0.0, %v620
        %v646 = vsub.f32 0.0, %v623
        %v647 = vsub.f32 0.0, %v626
        %v648 = vsub.f32 0.0, %v629
        %v649 = vsub.f32 0.0, %v632
        %v650 = vsub.f32 0.0, %v635
        %v651 = vsub.f32 0.0, %v638
        %v652 = vmul.f32 %v639, 1.442695
        %v653 = vpow.pop %v652
        %v654 = vmul.f32 %v640, 1.442695
        %v655 = vpow.pop %v654
        %v656 = vmul.f32 %v641, 1.442695
        %v657 = vpow.pop %v656
        %v658 = vmul.f32 %v642, 1.442695
        %v659 = vpow.pop %v658
        %v660 = vmul.f32 %v643, 1.442695
        %v661 = vpow.pop %v660
        %v662 = vmul.f32 %v644, 1.442695
        %v663 = vpow.pop %v662
        %v664 = vmul.f32 %v645, 1.442695
        %v665 = vpow.pop %v664
        %v666 = vmul.f32 %v646, 1.442695
        %v667 = vpow.pop %v666
        %v668 = vmul.f32 %v647, 1.442695
        %v669 = vpow.pop %v668
        %v670 = vmul.f32 %v648, 1.442695
        %v671 = vpow.pop %v670
        %v672 = vmul.f32 %v649, 1.442695
        %v673 = vpow.pop %v672
        %v674 = vmul.f32 %v650, 1.442695
        %v675 = vpow.pop %v674
        %v676 = vmul.f32 %v651, 1.442695
        %v677 = vpow.pop %v676
        %v678 = vadd.f32 %v653, 1.0
        %v679 = vadd.f32 %v655, 1.0
        %v680 = vadd.f32 %v657, 1.0
        %v681 = vadd.f32 %v659, 1.0
        %v682 = vadd.f32 %v661, 1.0
        %v683 = vadd.f32 %v663, 1.0
        %v684 = vadd.f32 %v665, 1.0
        %v685 = vadd.f32 %v667, 1.0
        %v686 = vadd.f32 %v669, 1.0
        %v687 = vadd.f32 %v671, 1.0
        %v688 = vadd.f32 %v673, 1.0
        %v689 = vadd.f32 %v675, 1.0
        %v690 = vadd.f32 %v677, 1.0
        %v691 = vrcp.pop %v678
        %v692 = vrcp.pop %v679
        %v693 = vrcp.pop %v680
        %v694 = vrcp.pop %v681
        %v695 = vrcp.pop %v682
        %v696 = vrcp.pop %v683
        %v697 = vrcp.pop %v684
        %v698 = vrcp.pop %v685
        %v699 = vrcp.pop %v686
        %v700 = vrcp.pop %v687
        %v701 = vrcp.pop %v688
        %v702 = vrcp.pop %v689
        %v703 = vrcp.pop %v690
        %vm704 = vcmask 7168
        %705 = vst.msk [vmem:[%s227] sm:$0xff] %vm704, %v691
        %706 = vst.msk [vmem:[%s227 + $0x8] sm:$0xff] %vm704, %v692
        %707 = vst.msk [vmem:[%s227 + $0x10] sm:$0xff] %vm704, %v693
        %708 = vst.msk [vmem:[%s227 + $0x18] sm:$0xff] %vm704, %v694
        %709 = vst.msk [vmem:[%s227 + $0x20] sm:$0xff] %vm704, %v695
        %710 = vst.msk [vmem:[%s227 + $0x28] sm:$0xff] %vm704, %v696
        %711 = vst.msk [vmem:[%s227 + $0x30] sm:$0xff] %vm704, %v697
        %712 = vst.msk [vmem:[%s227 + $0x38] sm:$0xff] %vm704, %v698
        %713 = vst.msk [vmem:[%s227 + $0x40] sm:$0xff] %vm704, %v699
        %714 = vst.msk [vmem:[%s227 + $0x48] sm:$0xff] %vm704, %v700
        %715 = vst.msk [vmem:[%s227 + $0x50] sm:$0xff] %vm704, %v701
        %716 = vst.msk [vmem:[%s227 + $0x58] sm:$0xff] %vm704, %v702
        %717 = vst.msk [vmem:[%s227 + $0x60] sm:$0xff] %vm704, %v703
        %s718 = sand.u32 %s117, 1
        %s719 = sand.u32 %s117, 1
        %s720 = smul.addr %s719, 104
        %s721 = scalar_lea.vmem [#allocation2], %s720
        // Predicated region
        $region37: #{tpu_custom_call.1} parent=35 // pred_check
          %p722 = pneg %p127
        $region38: #{tpu_custom_call.1} parent=35 // pred_check_branch
          %724 = sbr.rel (%p722) target = $region40
        $region39: #{tpu_custom_call.1} parent=35 // pred_region
          %s725 = smul.u32 13, %s15
          %s726 = ssub.s32 25, %s725
          %p727 = scmp.lt.s32.totalorder %s726, 13
          %s728 = scalar_select %p727, %s726, 13
          %s729 = smul.u32 128, %s728
          %p730 = scmp.ne.s32.totalorder 0, %s729
          %s731 = smul.addr %s725, 8
          %s732 = scalar_lea.vmem %s4, %s731
          // Predicated region
          $region41: #{tpu_custom_call.1} parent=39 // pred_check
            %p733 = pneg %p730
          $region42: #{tpu_custom_call.1} parent=39 // pred_check_branch
            %735 = sbr.rel (%p733) target = $region44
          $region43: #{tpu_custom_call.1} parent=39 // pred_region
            // Predicated region
            $region45: #{tpu_custom_call.1} parent=43 // pred_check
              _
            $region46: #{tpu_custom_call.1} parent=43 // pred_check_branch
              %737 = sbr.rel (0) target = $region48
            $region47: #{tpu_custom_call.1} parent=43 // pred_region
              // Predicated region
              $region67: #{tpu_custom_call.1} parent=47 // pred_check
                _
              $region68: #{tpu_custom_call.1} parent=47 // pred_check_branch
                %812 = sbr.rel (0) target = $region70
              $region69: #{tpu_custom_call.1} parent=47 // pred_region
                %s813 = sdiv.u32.pop %s728, 13
                %s814 = srem.u32.pop %s728, 13
                // While loop
                $region71: #{tpu_custom_call.1} parent=69 // loop_pre_header
                  _
                $region72: #{tpu_custom_call.1} parent=69 // loop_header
                  %s816 = sphi 0, %s818
                  %p817 = scmp.ge.s32.totalorder %s816, %s813
                  %s821 = sphi 0, %s852
                  %s822 = sphi %s721, %s855
                  %s823 = sphi %s732, %s856
                $region73: #{tpu_custom_call.1} parent=69 // loop_header_branch
                  %820 = sbr.rel (%p817) target = $region77
                $region74: #{tpu_custom_call.1} parent=69 // loop_body
                  %v824 = vld [vmem:[%s822] sm:$0xff]
                  %825 = vst [vmem:[%s823] sm:$0xff] %v824
                  %v826 = vld [vmem:[%s822 + $0x8] sm:$0xff]
                  %827 = vst [vmem:[%s823 + $0x8] sm:$0xff] %v826
                  %v828 = vld [vmem:[%s822 + $0x10] sm:$0xff]
                  %829 = vst [vmem:[%s823 + $0x10] sm:$0xff] %v828
                  %v830 = vld [vmem:[%s822 + $0x18] sm:$0xff]
                  %831 = vst [vmem:[%s823 + $0x18] sm:$0xff] %v830
                  %v832 = vld [vmem:[%s822 + $0x20] sm:$0xff]
                  %833 = vst [vmem:[%s823 + $0x20] sm:$0xff] %v832
                  %v834 = vld [vmem:[%s822 + $0x28] sm:$0xff]
                  %835 = vst [vmem:[%s823 + $0x28] sm:$0xff] %v834
                  %v836 = vld [vmem:[%s822 + $0x30] sm:$0xff]
                  %837 = vst [vmem:[%s823 + $0x30] sm:$0xff] %v836
                  %v838 = vld [vmem:[%s822 + $0x38] sm:$0xff]
                  %839 = vst [vmem:[%s823 + $0x38] sm:$0xff] %v838
                  %v840 = vld [vmem:[%s822 + $0x40] sm:$0xff]
                  %841 = vst [vmem:[%s823 + $0x40] sm:$0xff] %v840
                  %v842 = vld [vmem:[%s822 + $0x48] sm:$0xff]
                  %843 = vst [vmem:[%s823 + $0x48] sm:$0xff] %v842
                  %v844 = vld [vmem:[%s822 + $0x50] sm:$0xff]
                  %845 = vst [vmem:[%s823 + $0x50] sm:$0xff] %v844
                  %v846 = vld [vmem:[%s822 + $0x58] sm:$0xff]
                  %847 = vst [vmem:[%s823 + $0x58] sm:$0xff] %v846
                  %v848 = vld [vmem:[%s822 + $0x60] sm:$0xff]
                  %849 = vst [vmem:[%s823 + $0x60] sm:$0xff] %v848
                  %s850 = sadd.s32 1, %s821
                  %p851 = scmp.ge.s32.totalorder %s850, %s813
                  %s852 = scalar_select %p851, 0, %s850
                  %s853 = smul.u32 %s852, 104
                  %s854 = smul.u32 %s852, 104
                  %s855 = scalar_lea.vmem %s721, %s853 [#allocation2]
                  %s856 = scalar_lea.vmem %s732, %s854
                $region75: #{tpu_custom_call.1} parent=69 // loop_footer
                  %s818 = sadd.s32 %s816, 1
                $region76: #{tpu_custom_call.1} parent=69 // loop_footer_branch
                  %815 = sbr.rel target = $region72
                $region77: #{tpu_custom_call.1} parent=69 // loop_exit
                  _
                %s857 = sdiv.u32.pop %s728, 13
                %s858 = srem.u32.pop %s728, 13
                %s859 = smul.u32 %s857, 13
                %s860 = smul.u32 8, %s859
                %s861 = scalar_lea.vmem %s721, %s860 [#allocation2]
                %s862 = smul.u32 8, %s859
                %s863 = scalar_lea.vmem %s732, %s862
                // While loop
                $region78: #{tpu_custom_call.1} parent=69 // loop_pre_header
                  _
                $region79: #{tpu_custom_call.1} parent=69 // loop_header
                  %s865 = sphi 0, %s867
                  %p866 = scmp.ge.s32.totalorder %s865, %s858
                  %s870 = sphi 0, %s877
                  %s871 = sphi %s861, %s880
                  %s872 = sphi %s863, %s881
                $region80: #{tpu_custom_call.1} parent=69 // loop_header_branch
                  %869 = sbr.rel (%p866) target = $region84
                $region81: #{tpu_custom_call.1} parent=69 // loop_body
                  %v873 = vld [vmem:[%s871] sm:$0xff]
                  %874 = vst [vmem:[%s872] sm:$0xff] %v873
                  %s875 = sadd.s32 1, %s870
                  %p876 = scmp.ge.s32.totalorder %s875, %s858
                  %s877 = scalar_select %p876, 0, %s875
                  %s878 = smul.u32 %s877, 8
                  %s879 = smul.u32 %s877, 8
                  %s880 = scalar_lea.vmem %s861, %s878 [#allocation2]
                  %s881 = scalar_lea.vmem %s863, %s879
                $region82: #{tpu_custom_call.1} parent=69 // loop_footer
                  %s867 = sadd.s32 %s865, 1
                $region83: #{tpu_custom_call.1} parent=69 // loop_footer_branch
                  %864 = sbr.rel target = $region79
                $region84: #{tpu_custom_call.1} parent=69 // loop_exit
                  _
              $region70: #{tpu_custom_call.1} parent=47 // pred_fallthru
                _
              // Predicated region
              $region85: #{tpu_custom_call.1} parent=47 // pred_check
                _
              $region86: #{tpu_custom_call.1} parent=47 // pred_check_branch
                %883 = sbr.rel target = $region88
              $region87: #{tpu_custom_call.1} parent=47 // pred_region
                _
              $region88: #{tpu_custom_call.1} parent=47 // pred_fallthru
                _
            $region48: #{tpu_custom_call.1} parent=43 // pred_fallthru
              _
            // Predicated region
            $region49: #{tpu_custom_call.1} parent=43 // pred_check
              _
            $region50: #{tpu_custom_call.1} parent=43 // pred_check_branch
              %739 = sbr.rel target = $region52
            $region51: #{tpu_custom_call.1} parent=43 // pred_region
              %s741 = ssub.s32 256, 1
              %s742 = sdiv.u32.pop %s728, 13
              %s743 = srem.u32.pop %s728, 13
              // While loop
              $region53: #{tpu_custom_call.1} parent=51 // loop_pre_header
                _
              $region54: #{tpu_custom_call.1} parent=51 // loop_header
                %s745 = sphi 0, %s747
                %p746 = scmp.ge.s32.totalorder %s745, %s742
                %s750 = sphi 0, %s781
                %s751 = sphi %s721, %s784
                %s752 = sphi %s732, %s785
              $region55: #{tpu_custom_call.1} parent=51 // loop_header_branch
                %749 = sbr.rel (%p746) target = $region59
              $region56: #{tpu_custom_call.1} parent=51 // loop_body
                %v753 = vld [vmem:[%s751] sm:%s741]
                %754 = vst [vmem:[%s752] sm:%s741] %v753
                %v755 = vld [vmem:[%s751 + $0x8] sm:%s741]
                %756 = vst [vmem:[%s752 + $0x8] sm:%s741] %v755
                %v757 = vld [vmem:[%s751 + $0x10] sm:%s741]
                %758 = vst [vmem:[%s752 + $0x10] sm:%s741] %v757
                %v759 = vld [vmem:[%s751 + $0x18] sm:%s741]
                %760 = vst [vmem:[%s752 + $0x18] sm:%s741] %v759
                %v761 = vld [vmem:[%s751 + $0x20] sm:%s741]
                %762 = vst [vmem:[%s752 + $0x20] sm:%s741] %v761
                %v763 = vld [vmem:[%s751 + $0x28] sm:%s741]
                %764 = vst [vmem:[%s752 + $0x28] sm:%s741] %v763
                %v765 = vld [vmem:[%s751 + $0x30] sm:%s741]
                %766 = vst [vmem:[%s752 + $0x30] sm:%s741] %v765
                %v767 = vld [vmem:[%s751 + $0x38] sm:%s741]
                %768 = vst [vmem:[%s752 + $0x38] sm:%s741] %v767
                %v769 = vld [vmem:[%s751 + $0x40] sm:%s741]
                %770 = vst [vmem:[%s752 + $0x40] sm:%s741] %v769
                %v771 = vld [vmem:[%s751 + $0x48] sm:%s741]
                %772 = vst [vmem:[%s752 + $0x48] sm:%s741] %v771
                %v773 = vld [vmem:[%s751 + $0x50] sm:%s741]
                %774 = vst [vmem:[%s752 + $0x50] sm:%s741] %v773
                %v775 = vld [vmem:[%s751 + $0x58] sm:%s741]
                %776 = vst [vmem:[%s752 + $0x58] sm:%s741] %v775
                %v777 = vld [vmem:[%s751 + $0x60] sm:%s741]
                %778 = vst [vmem:[%s752 + $0x60] sm:%s741] %v777
                %s779 = sadd.s32 1, %s750
                %p780 = scmp.ge.s32.totalorder %s779, %s742
                %s781 = scalar_select %p780, 0, %s779
                %s782 = smul.u32 %s781, 104
                %s783 = smul.u32 %s781, 104
                %s784 = scalar_lea.vmem %s721, %s782 [#allocation2]
                %s785 = scalar_lea.vmem %s732, %s783
              $region57: #{tpu_custom_call.1} parent=51 // loop_footer
                %s747 = sadd.s32 %s745, 1
              $region58: #{tpu_custom_call.1} parent=51 // loop_footer_branch
                %744 = sbr.rel target = $region54
              $region59: #{tpu_custom_call.1} parent=51 // loop_exit
                _
              %s786 = sdiv.u32.pop %s728, 13
              %s787 = srem.u32.pop %s728, 13
              %s788 = smul.u32 %s786, 13
              %s789 = smul.u32 8, %s788
              %s790 = scalar_lea.vmem %s721, %s789 [#allocation2]
              %s791 = smul.u32 8, %s788
              %s792 = scalar_lea.vmem %s732, %s791
              // While loop
              $region60: #{tpu_custom_call.1} parent=51 // loop_pre_header
                _
              $region61: #{tpu_custom_call.1} parent=51 // loop_header
                %s794 = sphi 0, %s796
                %p795 = scmp.ge.s32.totalorder %s794, %s787
                %s799 = sphi 0, %s806
                %s800 = sphi %s790, %s809
                %s801 = sphi %s792, %s810
              $region62: #{tpu_custom_call.1} parent=51 // loop_header_branch
                %798 = sbr.rel (%p795) target = $region66
              $region63: #{tpu_custom_call.1} parent=51 // loop_body
                %v802 = vld [vmem:[%s800] sm:%s741]
                %803 = vst [vmem:[%s801] sm:%s741] %v802
                %s804 = sadd.s32 1, %s799
                %p805 = scmp.ge.s32.totalorder %s804, %s787
                %s806 = scalar_select %p805, 0, %s804
                %s807 = smul.u32 %s806, 8
                %s808 = smul.u32 %s806, 8
                %s809 = scalar_lea.vmem %s790, %s807 [#allocation2]
                %s810 = scalar_lea.vmem %s792, %s808
              $region64: #{tpu_custom_call.1} parent=51 // loop_footer
                %s796 = sadd.s32 %s794, 1
              $region65: #{tpu_custom_call.1} parent=51 // loop_footer_branch
                %793 = sbr.rel target = $region61
              $region66: #{tpu_custom_call.1} parent=51 // loop_exit
                _
            $region52: #{tpu_custom_call.1} parent=43 // pred_fallthru
              _
          $region44: #{tpu_custom_call.1} parent=39 // pred_fallthru
            _
          %884 = vnop
        $region40: #{tpu_custom_call.1} parent=35 // pred_fallthru
          _
      $region36: #{tpu_custom_call.1} parent=5 // pred_fallthru
        _
      %p885 = scmp.le.s32.totalorder 2, %s10
      // Predicated region
      $region89: #{tpu_custom_call.1} parent=5 // pred_check
        %p886 = pneg %p885
      $region90: #{tpu_custom_call.1} parent=5 // pred_check_branch
        %888 = sbr.rel (%p886) target = $region92
      $region91: #{tpu_custom_call.1} parent=5 // pred_region
        %s889 = ssub.s32 %s10, 2
        // Predicated region
        $region93: #{tpu_custom_call.1} parent=91 // pred_check
          %p890 = pneg %p133
        $region94: #{tpu_custom_call.1} parent=91 // pred_check_branch
          %892 = sbr.rel (%p890) target = $region96
        $region95: #{tpu_custom_call.1} parent=91 // pred_region
          %s893 = sand.u32 %s118, 1
          %s894 = sand.u32 %s118, 1
          %s895 = smul.addr %s894, 104
          %s896 = scalar_lea.vmem [#allocation2], %s895
        $region96: #{tpu_custom_call.1} parent=91 // pred_fallthru
          _
      $region92: #{tpu_custom_call.1} parent=5 // pred_fallthru
        _
    $region6: #{tpu_custom_call.1} parent=1 // loop_footer
      %s14 = sadd.s32 1, %s10
    $region7: #{tpu_custom_call.1} parent=1 // loop_footer_branch
      %9 = sbr.rel target = $region3
    $region8: #{tpu_custom_call.1} parent=1 // loop_exit
      _

</llo_original>
